<compile_context>
chip_gen: v7x
topology: tpu7x:2x2x1
jax: 0.10.0
libtpu: 0.0.40
codegen_flags: <defaults>
</compile_context>

<pallas_src>
import jax
import jax.numpy as jnp
from jax.experimental import pallas as pl
from jax.experimental.pallas import tpu as pltpu


def _round_up(n, m):
    return ((n + m - 1) // m) * m


def _physical_vmem_bytes():
    try:
        return int(pltpu.get_tpu_info().vmem_capacity_bytes)
    except Exception:
        return 64 << 20  # conservative fallback (v7x per-TC VMEM)


def _pick_block_m(B, in_features, x_bytes, block_m, vmem_budget):
    """Largest batch tile (multiple of 8) whose double-buffered, lane-padded x + out
    footprint fits the VMEM budget; balanced across tiles to minimize padding."""
    lane_in = max(128, _round_up(in_features, 128))
    per_row = 2 * (lane_in * x_bytes + 8 * 4)  # x tile + (1,1,bm) out tile, double-buffered
    bm_max = max(8, (vmem_budget // per_row) // 8 * 8)
    bm_max = min(bm_max, max(8, _round_up(block_m, 8)))
    num_tiles = pl.cdiv(B, bm_max)
    if num_tiles == 1 and B > 4096:
        num_tiles = 2  # keep both v7x TensorCores busy when the batch is large
    bm = _round_up(pl.cdiv(B, num_tiles), 8)
    return max(8, min(bm, bm_max))


def _mlp_kernel(x_ref, w1_ref, b1_ref, w2_ref, b2_ref, o_ref):
    # x_ref:  (TM, IN)   streamed batch tile
    # w1_ref: (H, IN)    torch-layout weight, pinned in VMEM
    # b1_ref: (H, 1)     bias column, pinned
    # w2_ref: (H, 1)     second-layer weight column, pinned
    # b2_ref: (1,)       scalar bias in SMEM
    # o_ref:  (1, 1, TM) lane-dense output row for this tile
    #
    # Layer 1 on the MXU with the batch mapped to lanes; the transpose is folded into
    # the operand feed: contract dim 1 of (H, IN) with dim 1 of (TM, IN) -> (H, TM).
    h_t = jax.lax.dot_general(
        w1_ref[...], x_ref[...],
        dimension_numbers=(((1,), (1,)), ((), ())),
        preferred_element_type=jnp.float32,
    )
    h_t = jnp.maximum(h_t + b1_ref[...], 0.0)  # bias + ReLU at full lane utilization

    # Layer 2 (hidden -> 1): VPU multiply + cross-sublane (XLU) reduction -> (1, TM).
    z = jnp.sum(h_t * w2_ref[...], axis=0, keepdims=True) + b2_ref[0]

    # Numerically safe sigmoid: clamp the exponent (sigmoid(z) == 0 in f32 for z < -80),
    # exp on the EUP, approximate reciprocal also on the EUP.
    z_neg = jnp.minimum(-z, 80.0)
    y = pl.reciprocal(1.0 + jnp.exp(z_neg), approx=True)
    o_ref[...] = y[None]  # (1, 1, TM) lane-dense store


def neuranet2_forward(x, w1, b1, w2, b2, *, block_m=32768, use_bf16=False):
    """x: (B, input); w1: (hidden, input); b1: (hidden,); w2: (1, hidden); b2: (1,).
    Returns (B, 1) f32 in [0, 1] = sigmoid(relu(x @ w1.T + b1) @ w2.T + b2)."""
    B, in_features = x.shape
    H = w1.shape[0]
    assert w1.shape == (H, in_features)
    assert w2.shape == (1, H)

    x_dtype = jnp.bfloat16 if use_bf16 else jnp.float32
    x = x.astype(x_dtype)
    w1 = w1.astype(x_dtype)
    b1_col = b1.reshape(H, 1).astype(jnp.float32)
    w2_col = w2.T.astype(jnp.float32)          # (H, 1)
    b2_s = b2.reshape(1).astype(jnp.float32)   # (1,) scalar for SMEM
    x_bytes = jnp.dtype(x_dtype).itemsize

    # Lane-padding-aware tile sizing against the detected physical VMEM.
    phys_vmem = _physical_vmem_bytes()
    bm = _pick_block_m(B, in_features, x_bytes, block_m, int(phys_vmem * 0.40))
    B_pad = _round_up(B, bm)
    if B_pad != B:
        x = jnp.pad(x, ((0, B_pad - B), (0, 0)))
    num_tiles = B_pad // bm

    # Explicit VMEM limit covering the real (lane/sublane-padded) footprint + margin.
    lane_in = max(128, _round_up(in_features, 128))
    H_pad = _round_up(H, 8)
    needed = (
        2 * bm * (lane_in * x_bytes + 8 * 4)                       # x + out, double-buffered
        + 2 * (H_pad * lane_in * x_bytes + 2 * H_pad * 128 * 4)    # pinned params (<=2 bufs)
    )
    vmem_limit = int(max(16 << 20, min(phys_vmem - (2 << 20), needed + (4 << 20))))

    cost = pl.CostEstimate(
        flops=2 * B_pad * in_features * H + 2 * B_pad * H,
        transcendentals=B_pad,
        bytes_accessed=(B_pad * in_features * x_bytes
                        + H * in_features * x_bytes
                        + (2 * H + 1) * 4
                        + B_pad * 4),
    )

    def build(single_buffer_pins):
        pin_kwargs = {"pipeline_mode": pl.Buffered(1)} if single_buffer_pins else {}
        return pl.pallas_call(
            _mlp_kernel,
            out_shape=jax.ShapeDtypeStruct((num_tiles, 1, bm), jnp.float32),
            grid=(num_tiles,),
            in_specs=[
                pl.BlockSpec((bm, in_features), lambda i: (i, 0)),               # x: streamed
                pl.BlockSpec((H, in_features), lambda i: (0, 0), **pin_kwargs),  # w1: pinned
                pl.BlockSpec((H, 1), lambda i: (0, 0), **pin_kwargs),            # b1: pinned
                pl.BlockSpec((H, 1), lambda i: (0, 0), **pin_kwargs),            # w2: pinned
                pl.BlockSpec(memory_space=pltpu.MemorySpace.SMEM),               # b2: scalar
            ],
            out_specs=pl.BlockSpec((1, 1, bm), lambda i: (i, 0, 0)),
            compiler_params=pltpu.CompilerParams(
                dimension_semantics=("parallel",),   # shard batch tiles across TCs (v7x)
                vmem_limit_bytes=vmem_limit,
            ),
            cost_estimate=cost,
        )

    try:
        out = build(True)(x, w1, b1_col, w2_col, b2_s)
    except Exception:
        # Fallback if this Pallas build rejects pipeline_mode on a BlockSpec; pinned
        # weights then just keep default double buffers (negligible at these sizes).
        out = build(False)(x, w1, b1_col, w2_col, b2_s)

    # (num_tiles, 1, bm) -> (B_pad, 1), drop padded rows.
    return out.reshape(B_pad, 1)[:B]


if __name__ == "__main__":
    # Small shapes consistent with the module: batch=8, input_size=32, hidden=32, output=1.
    batch, input_size, hidden_size = 8, 32, 32

    key = jax.random.PRNGKey(0)
    kx, kw1, kb1, kw2, kb2 = jax.random.split(key, 5)

    x = jax.random.normal(kx, (batch, input_size), dtype=jnp.float32)

    # Deterministic parameter init (Kaiming-uniform-like bounds, torch nn.Linear layout).
    bound1 = 1.0 / (input_size ** 0.5)
    w1 = jax.random.uniform(kw1, (hidden_size, input_size), jnp.float32, -bound1, bound1)
    b1 = jax.random.uniform(kb1, (hidden_size,), jnp.float32, -bound1, bound1)
    bound2 = 1.0 / (hidden_size ** 0.5)
    w2 = jax.random.uniform(kw2, (1, hidden_size), jnp.float32, -bound2, bound2)
    b2 = jax.random.uniform(kb2, (1,), jnp.float32, -bound2, bound2)

    def ref(xv):
        h = jnp.maximum(xv @ w1.T + b1, 0.0)
        return jax.nn.sigmoid(h @ w2.T + b2)

    # 1) f32 path, exact-layout check (tolerance loosened only for the EUP approx recip).
    y = neuranet2_forward(x, w1, b1, w2, b2)
    jax.block_until_ready(y)
    assert y.shape == (batch, 1)
    assert jnp.allclose(y, ref(x), atol=5e-3, rtol=5e-3), float(jnp.max(jnp.abs(y - ref(x))))

    # 2) Ragged batch (exercises padding and the tile-balancing logic).
    x2 = jax.random.normal(jax.random.PRNGKey(1), (300, input_size), dtype=jnp.float32)
    y2 = neuranet2_forward(x2, w1, b1, w2, b2)
    jax.block_until_ready(y2)
    assert y2.shape == (300, 1)
    assert jnp.allclose(y2, ref(x2), atol=5e-3, rtol=5e-3)

    # 3) bf16-streaming path (memory-bound ~2x win); looser tolerance for bf16 inputs.
    y3 = neuranet2_forward(x2, w1, b1, w2, b2, use_bf16=True)
    jax.block_until_ready(y3)
    assert y3.shape == (300, 1)
    assert jnp.allclose(y3, ref(x2), atol=3e-2, rtol=3e-2)

    print("KERNEL_OK")
</pallas_src>

<mosaic_0001>
module attributes {stable_mosaic.version = 11 : i64} {
  func.func @_mlp_kernel(%arg0: i32, %arg1: memref<8x32xf32, #tpu.memory_space<vmem>>, %arg2: memref<32x32xf32, #tpu.memory_space<vmem>>, %arg3: memref<32x1xf32, #tpu.memory_space<vmem>>, %arg4: memref<32x1xf32, #tpu.memory_space<vmem>>, %arg5: memref<1xf32, #tpu.memory_space<smem>>, %arg6: memref<1x1x8xf32, #tpu.memory_space<vmem>>) attributes {dimension_semantics = [#tpu.dimension_semantics<parallel>], iteration_bounds = array<i64: 1>, scalar_prefetch = 0 : i64, scratch_operands = 0 : i64, tpu.core_type = #tpu.core_type<tc>, window_params = [{transform_indices = @transform_0, window_bounds = array<i64: 8, 32>}, {pipeline_mode = #tpu.pipeline_mode<synchronous>, transform_indices = @transform_1, window_bounds = array<i64: 32, 32>}, {pipeline_mode = #tpu.pipeline_mode<synchronous>, transform_indices = @transform_2, window_bounds = array<i64: 32, 1>}, {pipeline_mode = #tpu.pipeline_mode<synchronous>, transform_indices = @transform_3, window_bounds = array<i64: 32, 1>}, {transform_indices = @transform_4, window_bounds = array<i64: 1>}, {transform_indices = @transform_5, window_bounds = array<i64: 1, 1, 8>}]} {
    %c0 = arith.constant 0 : index
    %c0_0 = arith.constant 0 : index
    %0 = vector.load %arg2[%c0, %c0_0] : memref<32x32xf32, #tpu.memory_space<vmem>>, vector<32x32xf32>
    %c0_1 = arith.constant 0 : index
    %c0_2 = arith.constant 0 : index
    %1 = vector.load %arg1[%c0_1, %c0_2] : memref<8x32xf32, #tpu.memory_space<vmem>>, vector<8x32xf32>
    %cst = arith.constant dense<0.000000e+00> : vector<32x8xf32>
    %2 = tpu.matmul %0, %1, %cst {dimension_numbers = #tpu.dot_dimension_numbers<[1], [1], [0], [0], [0, 0, 1, 0], [], []>} : vector<32x32xf32>, vector<8x32xf32>, vector<32x8xf32> -> vector<32x8xf32>
    %c0_3 = arith.constant 0 : index
    %c0_4 = arith.constant 0 : index
    %3 = vector.load %arg3[%c0_3, %c0_4] : memref<32x1xf32, #tpu.memory_space<vmem>>, vector<32x1xf32>
    %4 = vector.broadcast %3 : vector<32x1xf32> to vector<32x8xf32>
    %5 = arith.addf %2, %4 : vector<32x8xf32>
    %cst_5 = arith.constant 0.000000e+00 : f32
    %6 = vector.broadcast %cst_5 : f32 to vector<32x8xf32>
    %7 = arith.maximumf %5, %6 : vector<32x8xf32>
    %c0_6 = arith.constant 0 : index
    %c0_7 = arith.constant 0 : index
    %8 = vector.load %arg4[%c0_6, %c0_7] : memref<32x1xf32, #tpu.memory_space<vmem>>, vector<32x1xf32>
    %9 = vector.broadcast %8 : vector<32x1xf32> to vector<32x8xf32>
    %10 = arith.mulf %7, %9 : vector<32x8xf32>
    %cst_8 = arith.constant dense<0.000000e+00> : vector<8xf32>
    %11 = vector.multi_reduction <add>, %10, %cst_8 [0] : vector<32x8xf32> to vector<8xf32>
    %12 = vector.shape_cast %11 : vector<8xf32> to vector<1x8xf32>
    %c0_9 = arith.constant 0 : index
    %13 = memref.load %arg5[%c0_9] : memref<1xf32, #tpu.memory_space<smem>>
    %14 = vector.broadcast %13 : f32 to vector<1x8xf32>
    %15 = arith.addf %12, %14 : vector<1x8xf32>
    %cst_10 = arith.constant 0.000000e+00 : f32
    %16 = vector.broadcast %cst_10 : f32 to vector<1x8xf32>
    %17 = arith.subf %16, %15 : vector<1x8xf32>
    %cst_11 = arith.constant 8.000000e+01 : f32
    %18 = vector.broadcast %cst_11 : f32 to vector<1x8xf32>
    %19 = arith.minimumf %17, %18 : vector<1x8xf32>
    %20 = math.exp %19 : vector<1x8xf32>
    %cst_12 = arith.constant 1.000000e+00 : f32
    %21 = vector.broadcast %cst_12 : f32 to vector<1x8xf32>
    %22 = arith.addf %21, %20 : vector<1x8xf32>
    %23 = tpu.reciprocal %22 {approx = true} : vector<1x8xf32> -> vector<1x8xf32>
    %24 = vector.shape_cast %23 : vector<1x8xf32> to vector<1x1x8xf32>
    %c0_13 = arith.constant 0 : index
    %c0_14 = arith.constant 0 : index
    %c0_15 = arith.constant 0 : index
    %25 = vector.load %arg6[%c0_13, %c0_14, %c0_15] : memref<1x1x8xf32, #tpu.memory_space<vmem>>, vector<1x1x8xf32>
    tpu.vector_store %arg6[%c0_13, %c0_14, %c0_15], %24 {strides = array<i32>} : memref<1x1x8xf32, #tpu.memory_space<vmem>>, vector<1x1x8xf32>,
    return
  }
  func.func @transform_0(%arg0: i32) -> (i32, i32) {
    %c0_i32 = arith.constant 0 : i32
    %c0_i32_0 = arith.constant 0 : i32
    return %arg0, %c0_i32 : i32, i32
  }
  func.func @transform_1(%arg0: i32) -> (i32, i32) {
    %c0_i32 = arith.constant 0 : i32
    %c0_i32_0 = arith.constant 0 : i32
    %c0_i32_1 = arith.constant 0 : i32
    return %c0_i32, %c0_i32_0 : i32, i32
  }
  func.func @transform_2(%arg0: i32) -> (i32, i32) {
    %c0_i32 = arith.constant 0 : i32
    %c0_i32_0 = arith.constant 0 : i32
    %c0_i32_1 = arith.constant 0 : i32
    return %c0_i32, %c0_i32_0 : i32, i32
  }
  func.func @transform_3(%arg0: i32) -> (i32, i32) {
    %c0_i32 = arith.constant 0 : i32
    %c0_i32_0 = arith.constant 0 : i32
    %c0_i32_1 = arith.constant 0 : i32
    return %c0_i32, %c0_i32_0 : i32, i32
  }
  func.func @transform_4(%arg0: i32) -> i32 {
    %c0_i32 = arith.constant 0 : i32
    %c0_i32_0 = arith.constant 0 : i32
    return %c0_i32 : i32
  }
  func.func @transform_5(%arg0: i32) -> (i32, i32, i32) {
    %c0_i32 = arith.constant 0 : i32
    %c0_i32_0 = arith.constant 0 : i32
    %c0_i32_1 = arith.constant 0 : i32
    return %arg0, %c0_i32, %c0_i32_0 : i32, i32, i32
  }
}

module attributes {stable_mosaic.version = 11 : i64} {
  func.func @_mlp_kernel(%arg0: i32, %arg1: memref<8x32xf32, #tpu.memory_space<vmem>>, %arg2: memref<32x32xf32, #tpu.memory_space<vmem>>, %arg3: memref<32x1xf32, #tpu.memory_space<vmem>>, %arg4: memref<32x1xf32, #tpu.memory_space<vmem>>, %arg5: memref<1xf32, #tpu.memory_space<smem>>, %arg6: memref<1x1x8xf32, #tpu.memory_space<vmem>>) attributes {dimension_semantics = [#tpu.dimension_semantics<parallel>], iteration_bounds = array<i64: 1>, scalar_prefetch = 0 : i64, scratch_operands = 0 : i64, tpu.core_type = #tpu.core_type<tc>, window_params = [{transform_indices = @transform_0, window_bounds = array<i64: 8, 32>}, {pipeline_mode = #tpu.pipeline_mode<synchronous>, transform_indices = @transform_1, window_bounds = array<i64: 32, 32>}, {pipeline_mode = #tpu.pipeline_mode<synchronous>, transform_indices = @transform_2, window_bounds = array<i64: 32, 1>}, {pipeline_mode = #tpu.pipeline_mode<synchronous>, transform_indices = @transform_3, window_bounds = array<i64: 32, 1>}, {transform_indices = @transform_4, window_bounds = array<i64: 1>}, {transform_indices = @transform_5, window_bounds = array<i64: 1, 1, 8>}]} {
    %c0 = arith.constant 0 : index
    %c0_0 = arith.constant 0 : index
    %0 = vector.load %arg2[%c0, %c0_0] : memref<32x32xf32, #tpu.memory_space<vmem>>, vector<32x32xf32>
    %c0_1 = arith.constant 0 : index
    %c0_2 = arith.constant 0 : index
    %1 = vector.load %arg1[%c0_1, %c0_2] : memref<8x32xf32, #tpu.memory_space<vmem>>, vector<8x32xf32>
    %cst = arith.constant dense<0.000000e+00> : vector<32x8xf32>
    %2 = tpu.matmul %0, %1, %cst {dimension_numbers = #tpu.dot_dimension_numbers<[1], [1], [0], [0], [0, 0, 1, 0], [], []>} : vector<32x32xf32>, vector<8x32xf32>, vector<32x8xf32> -> vector<32x8xf32>
    %c0_3 = arith.constant 0 : index
    %c0_4 = arith.constant 0 : index
    %3 = vector.load %arg3[%c0_3, %c0_4] : memref<32x1xf32, #tpu.memory_space<vmem>>, vector<32x1xf32>
    %4 = vector.broadcast %3 : vector<32x1xf32> to vector<32x8xf32>
    %5 = arith.addf %2, %4 : vector<32x8xf32>
    %cst_5 = arith.constant 0.000000e+00 : f32
    %6 = vector.broadcast %cst_5 : f32 to vector<32x8xf32>
    %7 = arith.maximumf %5, %6 : vector<32x8xf32>
    %c0_6 = arith.constant 0 : index
    %c0_7 = arith.constant 0 : index
    %8 = vector.load %arg4[%c0_6, %c0_7] : memref<32x1xf32, #tpu.memory_space<vmem>>, vector<32x1xf32>
    %9 = vector.broadcast %8 : vector<32x1xf32> to vector<32x8xf32>
    %10 = arith.mulf %7, %9 : vector<32x8xf32>
    %cst_8 = arith.constant dense<0.000000e+00> : vector<8xf32>
    %11 = vector.multi_reduction <add>, %10, %cst_8 [0] : vector<32x8xf32> to vector<8xf32>
    %12 = vector.shape_cast %11 : vector<8xf32> to vector<1x8xf32>
    %c0_9 = arith.constant 0 : index
    %13 = memref.load %arg5[%c0_9] : memref<1xf32, #tpu.memory_space<smem>>
    %14 = vector.broadcast %13 : f32 to vector<1x8xf32>
    %15 = arith.addf %12, %14 : vector<1x8xf32>
    %cst_10 = arith.constant 0.000000e+00 : f32
    %16 = vector.broadcast %cst_10 : f32 to vector<1x8xf32>
    %17 = arith.subf %16, %15 : vector<1x8xf32>
    %cst_11 = arith.constant 8.000000e+01 : f32
    %18 = vector.broadcast %cst_11 : f32 to vector<1x8xf32>
    %19 = arith.minimumf %17, %18 : vector<1x8xf32>
    %20 = math.exp %19 : vector<1x8xf32>
    %cst_12 = arith.constant 1.000000e+00 : f32
    %21 = vector.broadcast %cst_12 : f32 to vector<1x8xf32>
    %22 = arith.addf %21, %20 : vector<1x8xf32>
    %23 = tpu.reciprocal %22 {approx = true} : vector<1x8xf32> -> vector<1x8xf32>
    %24 = vector.shape_cast %23 : vector<1x8xf32> to vector<1x1x8xf32>
    %c0_13 = arith.constant 0 : index
    %c0_14 = arith.constant 0 : index
    %c0_15 = arith.constant 0 : index
    %25 = vector.load %arg6[%c0_13, %c0_14, %c0_15] : memref<1x1x8xf32, #tpu.memory_space<vmem>>, vector<1x1x8xf32>
    tpu.vector_store %arg6[%c0_13, %c0_14, %c0_15], %24 {strides = array<i32>} : memref<1x1x8xf32, #tpu.memory_space<vmem>>, vector<1x1x8xf32>,
    return
  }
  func.func @transform_0(%arg0: i32) -> (i32, i32) {
    %c0_i32 = arith.constant 0 : i32
    %c0_i32_0 = arith.constant 0 : i32
    return %arg0, %c0_i32 : i32, i32
  }
  func.func @transform_1(%arg0: i32) -> (i32, i32) {
    %c0_i32 = arith.constant 0 : i32
    %c0_i32_0 = arith.constant 0 : i32
    %c0_i32_1 = arith.constant 0 : i32
    return %c0_i32, %c0_i32_0 : i32, i32
  }
  func.func @transform_2(%arg0: i32) -> (i32, i32) {
    %c0_i32 = arith.constant 0 : i32
    %c0_i32_0 = arith.constant 0 : i32
    %c0_i32_1 = arith.constant 0 : i32
    return %c0_i32, %c0_i32_0 : i32, i32
  }
  func.func @transform_3(%arg0: i32) -> (i32, i32) {
    %c0_i32 = arith.constant 0 : i32
    %c0_i32_0 = arith.constant 0 : i32
    %c0_i32_1 = arith.constant 0 : i32
    return %c0_i32, %c0_i32_0 : i32, i32
  }
  func.func @transform_4(%arg0: i32) -> i32 {
    %c0_i32 = arith.constant 0 : i32
    %c0_i32_0 = arith.constant 0 : i32
    return %c0_i32 : i32
  }
  func.func @transform_5(%arg0: i32) -> (i32, i32, i32) {
    %c0_i32 = arith.constant 0 : i32
    %c0_i32_0 = arith.constant 0 : i32
    %c0_i32_1 = arith.constant 0 : i32
    return %arg0, %c0_i32, %c0_i32_0 : i32, i32, i32
  }
}

</mosaic_0001>

<llo_original>
// kernel: tpu_custom_call.1
$region0: #{tpu_custom_call.1}
  #allocation0 [shape = 'u32[]', space=smem, size = 0x4, offset = 0x4, fixed_abs, tag = 'smem constant byte address 0x4 - core index']
  #allocation1 [shape = 'u32[144,128]{1,0:T(1,128)}', space=vmem, size = 0x12000, scoped, tag = 'internal scratch']
  #allocation2 [shape = 'f32[1]{0:T(128)S(6)}', space=smem, size = 0x200, scoped, tag = 'scoped memory for tpu_custom_call.1']
  %s0 = inlined_call_operand.vmem [shape: f32[8,32], index: 0, kind: input, shape index: {}]
  %s1 = inlined_call_operand.vmem [shape: f32[32,32], index: 1, kind: input, shape index: {}]
  %s2 = inlined_call_operand.vmem [shape: f32[32,1], index: 2, kind: input, shape index: {}]
  %s3 = inlined_call_operand.vmem [shape: f32[32,1], index: 3, kind: input, shape index: {}]
  %s4 = inlined_call_operand.<no memory space> [shape: f32[1], index: 4, kind: input, shape index: {}]
  %s5 = inlined_call_operand.hbm [shape: f32[1,1,8], index: 5, kind: output, shape index: {}]
  %s6 = sld [smem:[#allocation0]]
  $region30: #{tpu_custom_call.1} parent=0
    _
  %s8 = ssub.s32 1, %s6
  %s9 = scalar_select 0, %s8, %s6
  %10 = sst [smem:[#allocation2]] %s4
  $region1: #{tpu_custom_call.1} parent=0
    #allocation3 [shape = 'u8[512]{0}', space=vmem, size = 0x400, scoped, tag = 'output window, operand 0, single buffered']
    #allocation4 [shape = 's32[1]{0}', space=sflag, size = 0x4, scoped, tag = 'scoped memory for tpu_custom_call.1']
    %11 = vsyncpa [#allocation4], 0
    // Predicated region
    $region2: #{tpu_custom_call.1} parent=1 // pred_check
      _
    $region3: #{tpu_custom_call.1} parent=1 // pred_check_branch
      %13 = sbr.rel (0) target = $region5
    $region4: #{tpu_custom_call.1} parent=1 // pred_region
      _
    $region5: #{tpu_custom_call.1} parent=1 // pred_fallthru
      _
    // Predicated region
    $region6: #{tpu_custom_call.1} parent=1 // pred_check
      _
    $region7: #{tpu_custom_call.1} parent=1 // pred_check_branch
      %15 = sbr.rel (0) target = $region9
    $region8: #{tpu_custom_call.1} parent=1 // pred_region
      _
    $region9: #{tpu_custom_call.1} parent=1 // pred_fallthru
      _
    // Predicated region
    $region10: #{tpu_custom_call.1} parent=1 // pred_check
      _
    $region11: #{tpu_custom_call.1} parent=1 // pred_check_branch
      %17 = sbr.rel (0) target = $region13
    $region12: #{tpu_custom_call.1} parent=1 // pred_region
      _
    $region13: #{tpu_custom_call.1} parent=1 // pred_fallthru
      _
    // Predicated region
    $region14: #{tpu_custom_call.1} parent=1 // pred_check
      _
    $region15: #{tpu_custom_call.1} parent=1 // pred_check_branch
      %19 = sbr.rel (0) target = $region17
    $region16: #{tpu_custom_call.1} parent=1 // pred_region
      _
    $region17: #{tpu_custom_call.1} parent=1 // pred_fallthru
      _
    // Predicated region
    $region18: #{tpu_custom_call.1} parent=1 // pred_check
      _
    $region19: #{tpu_custom_call.1} parent=1 // pred_check_branch
      %21 = sbr.rel (0) target = $region21
    $region20: #{tpu_custom_call.1} parent=1 // pred_region
      _
    $region21: #{tpu_custom_call.1} parent=1 // pred_fallthru
      _
    %v22 = vld [vmem:[%s1] sm:$0xff]
    %v23 = vld [vmem:[%s1 + $0x8] sm:$0xff]
    %v24 = vld [vmem:[%s1 + $0x10] sm:$0xff]
    %v25 = vld [vmem:[%s1 + $0x18] sm:$0xff]
    %v26 = vld [vmem:[%s0] sm:$0xff]
    %v27 = vld [vmem:[%s2] sm:$0xff]
    %v28 = vld [vmem:[%s2 + $0x8] sm:$0xff]
    %v29 = vld [vmem:[%s2 + $0x10] sm:$0xff]
    %v30 = vld [vmem:[%s2 + $0x18] sm:$0xff]
    %32 = vset.pattern.permute.xlu0 0
    %33 = vperm.xlu0 %32, %v27
    %v34 = vpop.permute.xlu0 %33
    %37 = vset.pattern.permute.xlu0 0
    %38 = vperm.xlu0 %37, %v28
    %v39 = vpop.permute.xlu0 %38
    %42 = vset.pattern.permute.xlu0 0
    %43 = vperm.xlu0 %42, %v29
    %v44 = vpop.permute.xlu0 %43
    %47 = vset.pattern.permute.xlu0 0
    %48 = vperm.xlu0 %47, %v30
    %v49 = vpop.permute.xlu0 %48
    %vm51 = vcmask 261120
    %v53 = vsel %vm51, %v22, 0
    %v56 = vsel %vm51, %v23, 0
    %v59 = vsel %vm51, %v24, 0
    %v62 = vsel %vm51, %v25, 0
    %v65 = vsel %vm51, %v26, 0
    %67 = vmatprep.subr.mxu0 0.0
    %68 = vmatpush1.xpose.msra.mxu0 %v65
    %69 = vmatprep.subr.mxu0 0.0
    %70 = vmatpush1.xpose.msra.mxu0 0.0
    %71 = vmatprep.subr.mxu0 0.0
    %72 = vmatpush1.xpose.msra.mxu0 0.0
    %73 = vmatprep.subr.mxu0 0.0
    %74 = vmatpush1.xpose.msra.mxu0 0.0
    %75 = vmatprep.subr.mxu0 0.0
    %76 = vmatpush1.xpose.msra.mxu0 0.0
    %77 = vmatprep.subr.mxu0 0.0
    %78 = vmatpush1.xpose.msra.mxu0 0.0
    %79 = vmatprep.subr.mxu0 0.0
    %80 = vmatpush1.xpose.msra.mxu0 0.0
    %81 = vmatprep.subr.mxu0 0.0
    %82 = vmatpush1.xpose.msra.mxu0 0.0
    %83 = vmatprep.subr.mxu0 0.0
    %84 = vmatpush1.xpose.msra.mxu0 0.0
    %85 = vmatprep.subr.mxu0 0.0
    %86 = vmatpush1.xpose.msra.mxu0 0.0
    %87 = vmatprep.subr.mxu0 0.0
    %88 = vmatpush1.xpose.msra.mxu0 0.0
    %89 = vmatprep.subr.mxu0 0.0
    %90 = vmatpush1.xpose.msra.mxu0 0.0
    %91 = vmatprep.subr.mxu0 0.0
    %92 = vmatpush1.xpose.msra.mxu0 0.0
    %93 = vmatprep.subr.mxu0 0.0
    %94 = vmatpush1.xpose.msra.mxu0 0.0
    %95 = vmatprep.subr.mxu0 0.0
    %96 = vmatpush1.xpose.msra.mxu0 0.0
    %97 = vmatprep.subr.mxu0 0.0
    %98 = vmatpush1.xpose.msra.mxu0 0.0
    %99 = vmatprep.subr.mxu0 0.0
    %100 = vmatpush1.xpose.msra.mxu0 0.0
    %101 = vmatprep.subr.mxu0 0.0
    %102 = vmatpush1.xpose.msra.mxu0 0.0
    %103 = vmatprep.subr.mxu0 0.0
    %104 = vmatpush1.xpose.msra.mxu0 0.0
    %105 = vmatprep.subr.mxu0 0.0
    %106 = vmatpush1.xpose.msra.mxu0 0.0
    %107 = vmatprep.subr.mxu0 0.0
    %108 = vmatpush1.xpose.msra.mxu0 0.0
    %109 = vmatprep.subr.mxu0 0.0
    %110 = vmatpush1.xpose.msra.mxu0 0.0
    %111 = vmatprep.subr.mxu0 0.0
    %112 = vmatpush1.xpose.msra.mxu0 0.0
    %113 = vmatprep.subr.mxu0 0.0
    %114 = vmatpush1.xpose.msra.mxu0 0.0
    %115 = vmatprep.subr.mxu0 0.0
    %116 = vmatpush1.xpose.msra.mxu0 0.0
    %117 = vmatprep.subr.mxu0 0.0
    %118 = vmatpush1.xpose.msra.mxu0 0.0
    %119 = vmatprep.subr.mxu0 0.0
    %120 = vmatpush1.xpose.msra.mxu0 0.0
    %121 = vmatprep.subr.mxu0 0.0
    %122 = vmatpush1.xpose.msra.mxu0 0.0
    %123 = vmatprep.subr.mxu0 0.0
    %124 = vmatpush1.xpose.msra.mxu0 0.0
    %125 = vmatprep.subr.mxu0 0.0
    %126 = vmatpush1.xpose.msra.mxu0 0.0
    %127 = vmatprep.subr.mxu0 0.0
    %128 = vmatpush1.xpose.msra.mxu0 0.0
    %129 = vmatprep.subr.mxu0 0.0
    %130 = vmatpush1.xpose.msra.mxu0 0.0
    %131 = vmatprep.mubr.f32.mxu0 0.0
    %132 = vmatmul.mubr.f32.gmra.mrb[0].mxu0 %v53
    %v133 = vpop.f32.mrb[0].mxu0
    %v134 = vadd.f32 %v34, %v133
    %v135 = vpop.f32.mrb[0].mxu0
    %136 = vmatprep.mubr.f32.mxu0 0.0
    %137 = vmatmul.mubr.f32.gmra.mrb[0].mxu0 %v56
    %v138 = vpop.f32.mrb[0].mxu0
    %v139 = vadd.f32 %v39, %v138
    %v140 = vpop.f32.mrb[0].mxu0
    %141 = vmatprep.mubr.f32.mxu0 0.0
    %142 = vmatmul.mubr.f32.gmra.mrb[0].mxu0 %v59
    %v143 = vpop.f32.mrb[0].mxu0
    %v144 = vadd.f32 %v44, %v143
    %v145 = vpop.f32.mrb[0].mxu0
    %146 = vmatprep.mubr.f32.mxu0 0.0
    %147 = vmatmul.mubr.f32.gmra.mrb[0].mxu0 %v62
    %v148 = vpop.f32.mrb[0].mxu0
    %v149 = vadd.f32 %v49, %v148
    %v150 = vpop.f32.mrb[0].mxu0
    %151 = vdwg.mxu0
    %v152 = vmax.f32 %v134, 0.0
    %v153 = vmax.f32 %v139, 0.0
    %v154 = vmax.f32 %v144, 0.0
    %v155 = vmax.f32 %v149, 0.0
    %v156 = vld [vmem:[%s3] sm:$0xff]
    %v157 = vld [vmem:[%s3 + $0x8] sm:$0xff]
    %v158 = vld [vmem:[%s3 + $0x10] sm:$0xff]
    %v159 = vld [vmem:[%s3 + $0x18] sm:$0xff]
    %161 = vset.pattern.permute.xlu0 0
    %162 = vperm.xlu0 %161, %v156
    %v163 = vpop.permute.xlu0 %162
    %166 = vset.pattern.permute.xlu0 0
    %167 = vperm.xlu0 %166, %v157
    %v168 = vpop.permute.xlu0 %167
    %171 = vset.pattern.permute.xlu0 0
    %172 = vperm.xlu0 %171, %v158
    %v173 = vpop.permute.xlu0 %172
    %176 = vset.pattern.permute.xlu0 0
    %177 = vperm.xlu0 %176, %v159
    %v178 = vpop.permute.xlu0 %177
    %v180 = vmul.f32 %v152, %v163
    %v181 = vmul.f32 %v153, %v168
    %v182 = vmul.f32 %v154, %v173
    %v183 = vmul.f32 %v155, %v178
    %vm184 = vcmask 64512
    %v185 = vsel %vm184, %v180, 0.0
    %v186 = vsel %vm184, %v181, 0.0
    %v187 = vadd.f32 %v185, %v186
    %v188 = vsel %vm184, %v182, 0.0
    %v189 = vadd.f32 %v187, %v188
    %v190 = vsel %vm184, %v183, 0.0
    %v191 = vadd.f32 %v189, %v190
    %v192 = vrot.slane %v191, 4
    %v193 = vadd.f32 %v191, %v192
    %v194 = vrot.slane %v193, 2
    %v195 = vadd.f32 %v193, %v194
    %v196 = vrot.slane %v195, 1
    %v197 = vadd.f32 %v195, %v196
    %s198 = sld [smem:[#allocation2]]
    %v199 = vstv %s198
    %v200 = vadd.f32 %v197, %v199
    %v201 = vsub.f32 0.0, %v200
    %v202 = vmin.f32 %v201, 80.0
    %v203 = vmul.f32 %v202, 1.442695
    %v204 = vpow.pop %v203
    %v205 = vadd.f32 %v204, 1.0
    %v206 = vrcp.pop %v205
    %vm207 = vcmask 57344
    %208 = vst.msk [vmem:[#allocation3] sm:$0x1] %vm207, %v206
    // Predicated region
    $region22: #{tpu_custom_call.1} parent=1 // pred_check
      _
    $region23: #{tpu_custom_call.1} parent=1 // pred_check_branch
      %210 = sbr.rel (0) target = $region25
    $region24: #{tpu_custom_call.1} parent=1 // pred_region
      %s212 = ssub.s32 16, 16
      %213 = vsyncadd [#allocation4], %s212
      %s215 = sshll.u32 [#allocation3], 4
      %s216 = int_to_ptr.vmem [resolvable:$true] %s215
      %218 = dma.vmem_to_hbm [thread:$0]  %s216, 16, %s5, [#allocation4]
    $region25: #{tpu_custom_call.1} parent=1 // pred_fallthru
      _
    // Predicated region
    $region26: #{tpu_custom_call.1} parent=1 // pred_check
      _
    $region27: #{tpu_custom_call.1} parent=1 // pred_check_branch
      %220 = sbr.rel (0) target = $region29
    $region28: #{tpu_custom_call.1} parent=1 // pred_region
      %221 = dma.done [#allocation4], 16
    $region29: #{tpu_custom_call.1} parent=1 // pred_fallthru
      _
    %222 = vsyncpa [#allocation4], 1

// kernel: tpu_custom_call.1
$region0: #{tpu_custom_call.1}
  #allocation0 [shape = 'u32[]', space=smem, size = 0x4, offset = 0x4, fixed_abs, tag = 'smem constant byte address 0x4 - core index']
  #allocation1 [shape = 'u32[144,128]{1,0:T(1,128)}', space=vmem, size = 0x12000, scoped, tag = 'internal scratch']
  #allocation2 [shape = 'f32[1]{0:T(128)S(6)}', space=smem, size = 0x200, scoped, tag = 'scoped memory for tpu_custom_call.1']
  %s0 = inlined_call_operand.vmem [shape: f32[8,32], index: 0, kind: input, shape index: {}]
  %s1 = inlined_call_operand.vmem [shape: f32[32,32], index: 1, kind: input, shape index: {}]
  %s2 = inlined_call_operand.vmem [shape: f32[32,1], index: 2, kind: input, shape index: {}]
  %s3 = inlined_call_operand.vmem [shape: f32[32,1], index: 3, kind: input, shape index: {}]
  %s4 = inlined_call_operand.<no memory space> [shape: f32[1], index: 4, kind: input, shape index: {}]
  %s5 = inlined_call_operand.hbm [shape: f32[1,1,8], index: 5, kind: output, shape index: {}]
  %s6 = sld [smem:[#allocation0]]
  $region30: #{tpu_custom_call.1} parent=0
    _
  %s8 = ssub.s32 1, %s6
  %s9 = scalar_select 0, %s8, %s6
  %10 = sst [smem:[#allocation2]] %s4
  $region1: #{tpu_custom_call.1} parent=0
    #allocation3 [shape = 'u8[512]{0}', space=vmem, size = 0x400, scoped, tag = 'output window, operand 0, single buffered']
    #allocation4 [shape = 's32[1]{0}', space=sflag, size = 0x4, scoped, tag = 'scoped memory for tpu_custom_call.1']
    %11 = vsyncpa [#allocation4], 0
    // Predicated region
    $region2: #{tpu_custom_call.1} parent=1 // pred_check
      _
    $region3: #{tpu_custom_call.1} parent=1 // pred_check_branch
      %13 = sbr.rel (0) target = $region5
    $region4: #{tpu_custom_call.1} parent=1 // pred_region
      _
    $region5: #{tpu_custom_call.1} parent=1 // pred_fallthru
      _
    // Predicated region
    $region6: #{tpu_custom_call.1} parent=1 // pred_check
      _
    $region7: #{tpu_custom_call.1} parent=1 // pred_check_branch
      %15 = sbr.rel (0) target = $region9
    $region8: #{tpu_custom_call.1} parent=1 // pred_region
      _
    $region9: #{tpu_custom_call.1} parent=1 // pred_fallthru
      _
    // Predicated region
    $region10: #{tpu_custom_call.1} parent=1 // pred_check
      _
    $region11: #{tpu_custom_call.1} parent=1 // pred_check_branch
      %17 = sbr.rel (0) target = $region13
    $region12: #{tpu_custom_call.1} parent=1 // pred_region
      _
    $region13: #{tpu_custom_call.1} parent=1 // pred_fallthru
      _
    // Predicated region
    $region14: #{tpu_custom_call.1} parent=1 // pred_check
      _
    $region15: #{tpu_custom_call.1} parent=1 // pred_check_branch
      %19 = sbr.rel (0) target = $region17
    $region16: #{tpu_custom_call.1} parent=1 // pred_region
      _
    $region17: #{tpu_custom_call.1} parent=1 // pred_fallthru
      _
    // Predicated region
    $region18: #{tpu_custom_call.1} parent=1 // pred_check
      _
    $region19: #{tpu_custom_call.1} parent=1 // pred_check_branch
      %21 = sbr.rel (0) target = $region21
    $region20: #{tpu_custom_call.1} parent=1 // pred_region
      _
    $region21: #{tpu_custom_call.1} parent=1 // pred_fallthru
      _
    %v22 = vld [vmem:[%s1] sm:$0xff]
    %v23 = vld [vmem:[%s1 + $0x8] sm:$0xff]
    %v24 = vld [vmem:[%s1 + $0x10] sm:$0xff]
    %v25 = vld [vmem:[%s1 + $0x18] sm:$0xff]
    %v26 = vld [vmem:[%s0] sm:$0xff]
    %v27 = vld [vmem:[%s2] sm:$0xff]
    %v28 = vld [vmem:[%s2 + $0x8] sm:$0xff]
    %v29 = vld [vmem:[%s2 + $0x10] sm:$0xff]
    %v30 = vld [vmem:[%s2 + $0x18] sm:$0xff]
    %32 = vset.pattern.permute.xlu0 0
    %33 = vperm.xlu0 %32, %v27
    %v34 = vpop.permute.xlu0 %33
    %37 = vset.pattern.permute.xlu0 0
    %38 = vperm.xlu0 %37, %v28
    %v39 = vpop.permute.xlu0 %38
    %42 = vset.pattern.permute.xlu0 0
    %43 = vperm.xlu0 %42, %v29
    %v44 = vpop.permute.xlu0 %43
    %47 = vset.pattern.permute.xlu0 0
    %48 = vperm.xlu0 %47, %v30
    %v49 = vpop.permute.xlu0 %48
    %vm51 = vcmask 261120
    %v53 = vsel %vm51, %v22, 0
    %v56 = vsel %vm51, %v23, 0
    %v59 = vsel %vm51, %v24, 0
    %v62 = vsel %vm51, %v25, 0
    %v65 = vsel %vm51, %v26, 0
    %67 = vmatprep.subr.mxu0 0.0
    %68 = vmatpush1.xpose.msra.mxu0 %v65
    %69 = vmatprep.subr.mxu0 0.0
    %70 = vmatpush1.xpose.msra.mxu0 0.0
    %71 = vmatprep.subr.mxu0 0.0
    %72 = vmatpush1.xpose.msra.mxu0 0.0
    %73 = vmatprep.subr.mxu0 0.0
    %74 = vmatpush1.xpose.msra.mxu0 0.0
    %75 = vmatprep.subr.mxu0 0.0
    %76 = vmatpush1.xpose.msra.mxu0 0.0
    %77 = vmatprep.subr.mxu0 0.0
    %78 = vmatpush1.xpose.msra.mxu0 0.0
    %79 = vmatprep.subr.mxu0 0.0
    %80 = vmatpush1.xpose.msra.mxu0 0.0
    %81 = vmatprep.subr.mxu0 0.0
    %82 = vmatpush1.xpose.msra.mxu0 0.0
    %83 = vmatprep.subr.mxu0 0.0
    %84 = vmatpush1.xpose.msra.mxu0 0.0
    %85 = vmatprep.subr.mxu0 0.0
    %86 = vmatpush1.xpose.msra.mxu0 0.0
    %87 = vmatprep.subr.mxu0 0.0
    %88 = vmatpush1.xpose.msra.mxu0 0.0
    %89 = vmatprep.subr.mxu0 0.0
    %90 = vmatpush1.xpose.msra.mxu0 0.0
    %91 = vmatprep.subr.mxu0 0.0
    %92 = vmatpush1.xpose.msra.mxu0 0.0
    %93 = vmatprep.subr.mxu0 0.0
    %94 = vmatpush1.xpose.msra.mxu0 0.0
    %95 = vmatprep.subr.mxu0 0.0
    %96 = vmatpush1.xpose.msra.mxu0 0.0
    %97 = vmatprep.subr.mxu0 0.0
    %98 = vmatpush1.xpose.msra.mxu0 0.0
    %99 = vmatprep.subr.mxu0 0.0
    %100 = vmatpush1.xpose.msra.mxu0 0.0
    %101 = vmatprep.subr.mxu0 0.0
    %102 = vmatpush1.xpose.msra.mxu0 0.0
    %103 = vmatprep.subr.mxu0 0.0
    %104 = vmatpush1.xpose.msra.mxu0 0.0
    %105 = vmatprep.subr.mxu0 0.0
    %106 = vmatpush1.xpose.msra.mxu0 0.0
    %107 = vmatprep.subr.mxu0 0.0
    %108 = vmatpush1.xpose.msra.mxu0 0.0
    %109 = vmatprep.subr.mxu0 0.0
    %110 = vmatpush1.xpose.msra.mxu0 0.0
    %111 = vmatprep.subr.mxu0 0.0
    %112 = vmatpush1.xpose.msra.mxu0 0.0
    %113 = vmatprep.subr.mxu0 0.0
    %114 = vmatpush1.xpose.msra.mxu0 0.0
    %115 = vmatprep.subr.mxu0 0.0
    %116 = vmatpush1.xpose.msra.mxu0 0.0
    %117 = vmatprep.subr.mxu0 0.0
    %118 = vmatpush1.xpose.msra.mxu0 0.0
    %119 = vmatprep.subr.mxu0 0.0
    %120 = vmatpush1.xpose.msra.mxu0 0.0
    %121 = vmatprep.subr.mxu0 0.0
    %122 = vmatpush1.xpose.msra.mxu0 0.0
    %123 = vmatprep.subr.mxu0 0.0
    %124 = vmatpush1.xpose.msra.mxu0 0.0
    %125 = vmatprep.subr.mxu0 0.0
    %126 = vmatpush1.xpose.msra.mxu0 0.0
    %127 = vmatprep.subr.mxu0 0.0
    %128 = vmatpush1.xpose.msra.mxu0 0.0
    %129 = vmatprep.subr.mxu0 0.0
    %130 = vmatpush1.xpose.msra.mxu0 0.0
    %131 = vmatprep.mubr.f32.mxu0 0.0
    %132 = vmatmul.mubr.f32.gmra.mrb[0].mxu0 %v53
    %v133 = vpop.f32.mrb[0].mxu0
    %v134 = vadd.f32 %v34, %v133
    %v135 = vpop.f32.mrb[0].mxu0
    %136 = vmatprep.mubr.f32.mxu0 0.0
    %137 = vmatmul.mubr.f32.gmra.mrb[0].mxu0 %v56
    %v138 = vpop.f32.mrb[0].mxu0
    %v139 = vadd.f32 %v39, %v138
    %v140 = vpop.f32.mrb[0].mxu0
    %141 = vmatprep.mubr.f32.mxu0 0.0
    %142 = vmatmul.mubr.f32.gmra.mrb[0].mxu0 %v59
    %v143 = vpop.f32.mrb[0].mxu0
    %v144 = vadd.f32 %v44, %v143
    %v145 = vpop.f32.mrb[0].mxu0
    %146 = vmatprep.mubr.f32.mxu0 0.0
    %147 = vmatmul.mubr.f32.gmra.mrb[0].mxu0 %v62
    %v148 = vpop.f32.mrb[0].mxu0
    %v149 = vadd.f32 %v49, %v148
    %v150 = vpop.f32.mrb[0].mxu0
    %151 = vdwg.mxu0
    %v152 = vmax.f32 %v134, 0.0
    %v153 = vmax.f32 %v139, 0.0
    %v154 = vmax.f32 %v144, 0.0
    %v155 = vmax.f32 %v149, 0.0
    %v156 = vld [vmem:[%s3] sm:$0xff]
    %v157 = vld [vmem:[%s3 + $0x8] sm:$0xff]
    %v158 = vld [vmem:[%s3 + $0x10] sm:$0xff]
    %v159 = vld [vmem:[%s3 + $0x18] sm:$0xff]
    %161 = vset.pattern.permute.xlu0 0
    %162 = vperm.xlu0 %161, %v156
    %v163 = vpop.permute.xlu0 %162
    %166 = vset.pattern.permute.xlu0 0
    %167 = vperm.xlu0 %166, %v157
    %v168 = vpop.permute.xlu0 %167
    %171 = vset.pattern.permute.xlu0 0
    %172 = vperm.xlu0 %171, %v158
    %v173 = vpop.permute.xlu0 %172
    %176 = vset.pattern.permute.xlu0 0
    %177 = vperm.xlu0 %176, %v159
    %v178 = vpop.permute.xlu0 %177
    %v180 = vmul.f32 %v152, %v163
    %v181 = vmul.f32 %v153, %v168
    %v182 = vmul.f32 %v154, %v173
    %v183 = vmul.f32 %v155, %v178
    %vm184 = vcmask 64512
    %v185 = vsel %vm184, %v180, 0.0
    %v186 = vsel %vm184, %v181, 0.0
    %v187 = vadd.f32 %v185, %v186
    %v188 = vsel %vm184, %v182, 0.0
    %v189 = vadd.f32 %v187, %v188
    %v190 = vsel %vm184, %v183, 0.0
    %v191 = vadd.f32 %v189, %v190
    %v192 = vrot.slane %v191, 4
    %v193 = vadd.f32 %v191, %v192
    %v194 = vrot.slane %v193, 2
    %v195 = vadd.f32 %v193, %v194
    %v196 = vrot.slane %v195, 1
    %v197 = vadd.f32 %v195, %v196
    %s198 = sld [smem:[#allocation2]]
    %v199 = vstv %s198
    %v200 = vadd.f32 %v197, %v199
    %v201 = vsub.f32 0.0, %v200
    %v202 = vmin.f32 %v201, 80.0
    %v203 = vmul.f32 %v202, 1.442695
    %v204 = vpow.pop %v203
    %v205 = vadd.f32 %v204, 1.0
    %v206 = vrcp.pop %v205
    %vm207 = vcmask 57344
    %208 = vst.msk [vmem:[#allocation3] sm:$0x1] %vm207, %v206
    // Predicated region
    $region22: #{tpu_custom_call.1} parent=1 // pred_check
      _
    $region23: #{tpu_custom_call.1} parent=1 // pred_check_branch
      %210 = sbr.rel (0) target = $region25
    $region24: #{tpu_custom_call.1} parent=1 // pred_region
      %s212 = ssub.s32 16, 16
      %213 = vsyncadd [#allocation4], %s212
      %s215 = sshll.u32 [#allocation3], 4
      %s216 = int_to_ptr.vmem [resolvable:$true] %s215
      %218 = dma.vmem_to_hbm [thread:$0]  %s216, 16, %s5, [#allocation4]
    $region25: #{tpu_custom_call.1} parent=1 // pred_fallthru
      _
    // Predicated region
    $region26: #{tpu_custom_call.1} parent=1 // pred_check
      _
    $region27: #{tpu_custom_call.1} parent=1 // pred_check_branch
      %220 = sbr.rel (0) target = $region29
    $region28: #{tpu_custom_call.1} parent=1 // pred_region
      %221 = dma.done [#allocation4], 16
    $region29: #{tpu_custom_call.1} parent=1 // pred_fallthru
      _
    %222 = vsyncpa [#allocation4], 1

</llo_original>
